<compile_context>
chip_gen: v6e
topology: v6e:2x2x1
jax: 0.10.0
libtpu: 0.0.40
codegen_flags: <defaults>
</compile_context>

<pallas_src>
import functools
import math

import jax
import jax.numpy as jnp
from jax import lax
from jax.experimental import pallas as pl
from jax.experimental.pallas import tpu as pltpu


# ---------------------------------------------------------------------------
# Kernel: one (batch, head) tile per grid step
# ---------------------------------------------------------------------------
def mha_kernel(x_ref, wq_ref, wk_ref, wv_ref, bq_ref, bk_ref, bv_ref,
               wo_ref, bo_ref, out_ref, probs_ref, acc_ref, *, scale):
    """Fused multi-head attention forward for one (batch, head) grid step.

    x_ref:     (1, S, D)    hidden states for this batch element
    wq/wk/wv:  (1, D, hd)   per-head projection weights (already transposed)
    bq/bk/bv:  (1, 1, hd)   per-head projection biases
    wo_ref:    (1, hd, D)   per-head slice of the output projection
    bo_ref:    (1, D)       output projection bias
    out_ref:   (1, S, D)    attention output (accumulated over heads)
    probs_ref: (1, 1, S, S) attention probabilities for this head
    acc_ref:   (S, D) f32   VMEM accumulator (persists across head axis)
    """
    h = pl.program_id(1)
    n_heads = pl.num_programs(1)

    @pl.when(h == 0)
    def _():
        acc_ref[...] = jnp.zeros_like(acc_ref)

    x = x_ref[0].astype(jnp.float32)                       # (S, D)

    q = jnp.dot(x, wq_ref[0], preferred_element_type=jnp.float32) + bq_ref[0]
    k = jnp.dot(x, wk_ref[0], preferred_element_type=jnp.float32) + bk_ref[0]
    v = jnp.dot(x, wv_ref[0], preferred_element_type=jnp.float32) + bv_ref[0]

    # scores = (q @ k^T) * scale   -- contraction on last dims (no transpose op)
    s = lax.dot_general(q, k, (((1,), (1,)), ((), ())),
                        preferred_element_type=jnp.float32) * scale

    # numerically stable softmax over the last axis
    m = jnp.max(s, axis=-1, keepdims=True)
    e = jnp.exp(s - m)
    p = e / jnp.sum(e, axis=-1, keepdims=True)             # (S, S)
    probs_ref[0, 0] = p.astype(probs_ref.dtype)

    # context for this head, then its contribution to the output projection
    ctx = jnp.dot(p, v, preferred_element_type=jnp.float32)          # (S, hd)
    acc_ref[...] += jnp.dot(ctx, wo_ref[0],
                            preferred_element_type=jnp.float32)       # (S, D)

    @pl.when(h == n_heads - 1)
    def _():
        out_ref[0] = (acc_ref[...] + bo_ref[...]).astype(out_ref.dtype)


# ---------------------------------------------------------------------------
# Wrapper
# ---------------------------------------------------------------------------
def attention123_forward(hidden_states, params, num_heads, vis=True):
    """hidden_states: (B, S, D); params hold PyTorch-layout Linear weights.

    Returns (attention_output (B, S, D), attention_probs (B, nh, S, S) or None).
    """
    x = hidden_states.astype(jnp.float32)
    B, S, D = x.shape
    assert D % num_heads == 0
    hd = D // num_heads
    scale = 1.0 / math.sqrt(hd)

    # PyTorch Linear: y = x @ W^T + b with W of shape (out, in).
    # Re-layout once into per-head slabs consumed by the kernel.
    def per_head_in(w):                      # (D_out, D_in) -> (nh, D_in, hd)
        return jnp.transpose(w.reshape(num_heads, hd, D), (0, 2, 1))

    wq = per_head_in(params["wq"])
    wk = per_head_in(params["wk"])
    wv = per_head_in(params["wv"])
    bq = params["bq"].reshape(num_heads, 1, hd)
    bk = params["bk"].reshape(num_heads, 1, hd)
    bv = params["bv"].reshape(num_heads, 1, hd)
    wo = jnp.transpose(params["wo"]).reshape(num_heads, hd, D)   # (nh, hd, D)
    bo = params["bo"].reshape(1, D)

    kernel = functools.partial(mha_kernel, scale=scale)

    out, probs = pl.pallas_call(
        kernel,
        out_shape=(
            jax.ShapeDtypeStruct((B, S, D), jnp.float32),
            jax.ShapeDtypeStruct((B, num_heads, S, S), jnp.float32),
        ),
        grid=(B, num_heads),
        in_specs=[
            pl.BlockSpec((1, S, D), lambda b, h: (b, 0, 0)),   # x
            pl.BlockSpec((1, D, hd), lambda b, h: (h, 0, 0)),  # wq
            pl.BlockSpec((1, D, hd), lambda b, h: (h, 0, 0)),  # wk
            pl.BlockSpec((1, D, hd), lambda b, h: (h, 0, 0)),  # wv
            pl.BlockSpec((1, 1, hd), lambda b, h: (h, 0, 0)),  # bq
            pl.BlockSpec((1, 1, hd), lambda b, h: (h, 0, 0)),  # bk
            pl.BlockSpec((1, 1, hd), lambda b, h: (h, 0, 0)),  # bv
            pl.BlockSpec((1, hd, D), lambda b, h: (h, 0, 0)),  # wo
            pl.BlockSpec((1, D), lambda b, h: (0, 0)),         # bo
        ],
        out_specs=(
            pl.BlockSpec((1, S, D), lambda b, h: (b, 0, 0)),        # out (resident over h)
            pl.BlockSpec((1, 1, S, S), lambda b, h: (b, h, 0, 0)),  # probs
        ),
        scratch_shapes=[pltpu.VMEM((S, D), jnp.float32)],
        compiler_params=pltpu.CompilerParams(
            dimension_semantics=("parallel", "arbitrary")),
    )(x, wq, wk, wv, bq, bk, bv, wo, bo)

    return out, (probs if vis else None)


# ---------------------------------------------------------------------------
# Pure-JAX reference (mirrors the PyTorch forward, dropout = identity)
# ---------------------------------------------------------------------------
def _reference_forward(x, params, num_heads):
    B, S, D = x.shape
    hd = D // num_heads

    def lin(z, w, b):
        return z @ w.T + b

    def split_heads(z):                       # (B,S,D) -> (B,nh,S,hd)
        return z.reshape(B, S, num_heads, hd).transpose(0, 2, 1, 3)

    q = split_heads(lin(x, params["wq"], params["bq"]))
    k = split_heads(lin(x, params["wk"], params["bk"]))
    v = split_heads(lin(x, params["wv"], params["bv"]))

    scores = jnp.einsum("bhqd,bhkd->bhqk", q, k) / math.sqrt(hd)
    probs = jax.nn.softmax(scores, axis=-1)
    ctx = jnp.einsum("bhqk,bhkd->bhqd", probs, v)
    ctx = ctx.transpose(0, 2, 1, 3).reshape(B, S, D)
    out = ctx @ params["wo"].T + params["bo"]
    return out, probs


# ---------------------------------------------------------------------------
if __name__ == "__main__":
    B, S, hidden, num_heads = 2, 8, 32, 4     # head_size = 8

    key = jax.random.PRNGKey(0)
    ks = jax.random.split(key, 9)
    sc = 1.0 / math.sqrt(hidden)

    params = {
        # PyTorch nn.Linear layout: weight (out_features, in_features), bias (out_features,)
        "wq": jax.random.normal(ks[0], (hidden, hidden), jnp.float32) * sc,
        "wk": jax.random.normal(ks[1], (hidden, hidden), jnp.float32) * sc,
        "wv": jax.random.normal(ks[2], (hidden, hidden), jnp.float32) * sc,
        "wo": jax.random.normal(ks[3], (hidden, hidden), jnp.float32) * sc,
        "bq": jax.random.normal(ks[4], (hidden,), jnp.float32) * 0.1,
        "bk": jax.random.normal(ks[5], (hidden,), jnp.float32) * 0.1,
        "bv": jax.random.normal(ks[6], (hidden,), jnp.float32) * 0.1,
        "bo": jax.random.normal(ks[7], (hidden,), jnp.float32) * 0.1,
    }
    x = jax.random.normal(ks[8], (B, S, hidden), jnp.float32)

    out, probs = attention123_forward(x, params, num_heads, vis=True)
    out = jax.block_until_ready(out)
    probs = jax.block_until_ready(probs)

    out_ref, probs_ref = _reference_forward(x, params, num_heads)
    out_ref = jax.block_until_ready(out_ref)

    assert out.shape == (B, S, hidden), out.shape
    assert probs.shape == (B, num_heads, S, S), probs.shape
    assert jnp.allclose(out, out_ref, atol=1e-3, rtol=1e-3), (
        float(jnp.max(jnp.abs(out - out_ref))))
    assert jnp.allclose(probs, probs_ref, atol=1e-3, rtol=1e-3), (
        float(jnp.max(jnp.abs(probs - probs_ref))))

    print("KERNEL_OK")
</pallas_src>

<mosaic_0001>
module attributes {stable_mosaic.version = 11 : i64} {
  func.func @mha_kernel(%arg0: i32, %arg1: i32, %arg2: memref<1x8x32xf32, #tpu.memory_space<vmem>>, %arg3: memref<1x32x8xf32, #tpu.memory_space<vmem>>, %arg4: memref<1x32x8xf32, #tpu.memory_space<vmem>>, %arg5: memref<1x32x8xf32, #tpu.memory_space<vmem>>, %arg6: memref<1x1x8xf32, #tpu.memory_space<vmem>>, %arg7: memref<1x1x8xf32, #tpu.memory_space<vmem>>, %arg8: memref<1x1x8xf32, #tpu.memory_space<vmem>>, %arg9: memref<1x8x32xf32, #tpu.memory_space<vmem>>, %arg10: memref<1x32xf32, #tpu.memory_space<vmem>>, %arg11: memref<1x8x32xf32, #tpu.memory_space<vmem>>, %arg12: memref<1x1x8x8xf32, #tpu.memory_space<vmem>>, %arg13: memref<8x32xf32, #tpu.memory_space<vmem>>) attributes {dimension_semantics = [#tpu.dimension_semantics<parallel>, #tpu.dimension_semantics<arbitrary>], iteration_bounds = array<i64: 2, 4>, scalar_prefetch = 0 : i64, scratch_operands = 1 : i64, tpu.core_type = #tpu.core_type<tc>, window_params = [{transform_indices = @transform_0, window_bounds = array<i64: 1, 8, 32>}, {transform_indices = @transform_1, window_bounds = array<i64: 1, 32, 8>}, {transform_indices = @transform_2, window_bounds = array<i64: 1, 32, 8>}, {transform_indices = @transform_3, window_bounds = array<i64: 1, 32, 8>}, {transform_indices = @transform_4, window_bounds = array<i64: 1, 1, 8>}, {transform_indices = @transform_5, window_bounds = array<i64: 1, 1, 8>}, {transform_indices = @transform_6, window_bounds = array<i64: 1, 1, 8>}, {transform_indices = @transform_7, window_bounds = array<i64: 1, 8, 32>}, {pipeline_mode = #tpu.pipeline_mode<synchronous>, transform_indices = @transform_8, window_bounds = array<i64: 1, 32>}, {transform_indices = @transform_9, window_bounds = array<i64: 1, 8, 32>}, {transform_indices = @transform_10, window_bounds = array<i64: 1, 1, 8, 8>}]} {
    %c0_i32 = arith.constant 0 : i32
    %0 = arith.cmpi eq, %arg1, %c0_i32 : i32
    %1 = arith.extui %0 : i1 to i32
    %c0_i32_0 = arith.constant 0 : i32
    %2 = arith.cmpi ne, %1, %c0_i32_0 : i32
    scf.if %2 {
      %cst_41 = arith.constant 0.000000e+00 : f32
      %51 = vector.broadcast %cst_41 : f32 to vector<8x32xf32>
      %c0_42 = arith.constant 0 : index
      %c0_43 = arith.constant 0 : index
      %52 = vector.load %arg13[%c0_42, %c0_43] : memref<8x32xf32, #tpu.memory_space<vmem>>, vector<8x32xf32>
      tpu.vector_store %arg13[%c0_42, %c0_43], %51 {strides = array<i32>} : memref<8x32xf32, #tpu.memory_space<vmem>>, vector<8x32xf32>,
    } else {
    }
    %c0 = arith.constant 0 : index
    %c0_1 = arith.constant 0 : index
    %c0_2 = arith.constant 0 : index
    %3 = vector.load %arg2[%c0, %c0_1, %c0_2] : memref<1x8x32xf32, #tpu.memory_space<vmem>>, vector<1x8x32xf32>
    %4 = vector.shape_cast %3 : vector<1x8x32xf32> to vector<8x32xf32>
    %c0_3 = arith.constant 0 : index
    %c0_4 = arith.constant 0 : index
    %c0_5 = arith.constant 0 : index
    %5 = vector.load %arg3[%c0_3, %c0_4, %c0_5] : memref<1x32x8xf32, #tpu.memory_space<vmem>>, vector<1x32x8xf32>
    %6 = vector.shape_cast %5 : vector<1x32x8xf32> to vector<32x8xf32>
    %cst = arith.constant dense<0.000000e+00> : vector<8x8xf32>
    %7 = tpu.matmul %4, %6, %cst {dimension_numbers = #tpu.dot_dimension_numbers<[1], [0], [0], [1], [0, 0, 1, 1], [], []>} : vector<8x32xf32>, vector<32x8xf32>, vector<8x8xf32> -> vector<8x8xf32>
    %c0_6 = arith.constant 0 : index
    %c0_7 = arith.constant 0 : index
    %c0_8 = arith.constant 0 : index
    %8 = vector.load %arg6[%c0_6, %c0_7, %c0_8] : memref<1x1x8xf32, #tpu.memory_space<vmem>>, vector<1x1x8xf32>
    %9 = vector.shape_cast %8 : vector<1x1x8xf32> to vector<1x8xf32>
    %10 = vector.broadcast %9 : vector<1x8xf32> to vector<8x8xf32>
    %11 = arith.addf %7, %10 : vector<8x8xf32>
    %c0_9 = arith.constant 0 : index
    %c0_10 = arith.constant 0 : index
    %c0_11 = arith.constant 0 : index
    %12 = vector.load %arg4[%c0_9, %c0_10, %c0_11] : memref<1x32x8xf32, #tpu.memory_space<vmem>>, vector<1x32x8xf32>
    %13 = vector.shape_cast %12 : vector<1x32x8xf32> to vector<32x8xf32>
    %cst_12 = arith.constant dense<0.000000e+00> : vector<8x8xf32>
    %14 = tpu.matmul %4, %13, %cst_12 {dimension_numbers = #tpu.dot_dimension_numbers<[1], [0], [0], [1], [0, 0, 1, 1], [], []>} : vector<8x32xf32>, vector<32x8xf32>, vector<8x8xf32> -> vector<8x8xf32>
    %c0_13 = arith.constant 0 : index
    %c0_14 = arith.constant 0 : index
    %c0_15 = arith.constant 0 : index
    %15 = vector.load %arg7[%c0_13, %c0_14, %c0_15] : memref<1x1x8xf32, #tpu.memory_space<vmem>>, vector<1x1x8xf32>
    %16 = vector.shape_cast %15 : vector<1x1x8xf32> to vector<1x8xf32>
    %17 = vector.broadcast %16 : vector<1x8xf32> to vector<8x8xf32>
    %18 = arith.addf %14, %17 : vector<8x8xf32>
    %c0_16 = arith.constant 0 : index
    %c0_17 = arith.constant 0 : index
    %c0_18 = arith.constant 0 : index
    %19 = vector.load %arg5[%c0_16, %c0_17, %c0_18] : memref<1x32x8xf32, #tpu.memory_space<vmem>>, vector<1x32x8xf32>
    %20 = vector.shape_cast %19 : vector<1x32x8xf32> to vector<32x8xf32>
    %cst_19 = arith.constant dense<0.000000e+00> : vector<8x8xf32>
    %21 = tpu.matmul %4, %20, %cst_19 {dimension_numbers = #tpu.dot_dimension_numbers<[1], [0], [0], [1], [0, 0, 1, 1], [], []>} : vector<8x32xf32>, vector<32x8xf32>, vector<8x8xf32> -> vector<8x8xf32>
    %c0_20 = arith.constant 0 : index
    %c0_21 = arith.constant 0 : index
    %c0_22 = arith.constant 0 : index
    %22 = vector.load %arg8[%c0_20, %c0_21, %c0_22] : memref<1x1x8xf32, #tpu.memory_space<vmem>>, vector<1x1x8xf32>
    %23 = vector.shape_cast %22 : vector<1x1x8xf32> to vector<1x8xf32>
    %24 = vector.broadcast %23 : vector<1x8xf32> to vector<8x8xf32>
    %25 = arith.addf %21, %24 : vector<8x8xf32>
    %cst_23 = arith.constant dense<0.000000e+00> : vector<8x8xf32>
    %26 = tpu.matmul %11, %18, %cst_23 {dimension_numbers = #tpu.dot_dimension_numbers<[1], [1], [0], [0], [0, 0, 1, 0], [], []>} : vector<8x8xf32>, vector<8x8xf32>, vector<8x8xf32> -> vector<8x8xf32>
    %cst_24 = arith.constant 0.353553385 : f32
    %27 = vector.broadcast %cst_24 : f32 to vector<8x8xf32>
    %28 = arith.mulf %26, %27 : vector<8x8xf32>
    %cst_25 = arith.constant dense<0xFF800000> : vector<8xf32>
    %29 = vector.multi_reduction <maximumf>, %28, %cst_25 [1] : vector<8x8xf32> to vector<8xf32>
    %30 = vector.shape_cast %29 : vector<8xf32> to vector<8x1xf32>
    %31 = vector.broadcast %30 : vector<8x1xf32> to vector<8x8xf32>
    %32 = arith.subf %28, %31 : vector<8x8xf32>
    %33 = math.exp %32 : vector<8x8xf32>
    %cst_26 = arith.constant dense<0.000000e+00> : vector<8xf32>
    %34 = vector.multi_reduction <add>, %33, %cst_26 [1] : vector<8x8xf32> to vector<8xf32>
    %35 = vector.shape_cast %34 : vector<8xf32> to vector<8x1xf32>
    %36 = vector.broadcast %35 : vector<8x1xf32> to vector<8x8xf32>
    %37 = arith.divf %33, %36 : vector<8x8xf32>
    %c0_27 = arith.constant 0 : index
    %c0_28 = arith.constant 0 : index
    %c0_29 = arith.constant 0 : index
    %c0_30 = arith.constant 0 : index
    %38 = vector.load %arg12[%c0_27, %c0_28, %c0_29, %c0_30] : memref<1x1x8x8xf32, #tpu.memory_space<vmem>>, vector<1x1x8x8xf32>
    %39 = vector.shape_cast %38 : vector<1x1x8x8xf32> to vector<8x8xf32>
    %40 = vector.shape_cast %37 : vector<8x8xf32> to vector<1x1x8x8xf32>
    tpu.vector_store %arg12[%c0_27, %c0_28, %c0_29, %c0_30], %40 {strides = array<i32>} : memref<1x1x8x8xf32, #tpu.memory_space<vmem>>, vector<1x1x8x8xf32>,
    %cst_31 = arith.constant dense<0.000000e+00> : vector<8x8xf32>
    %41 = tpu.matmul %37, %25, %cst_31 {dimension_numbers = #tpu.dot_dimension_numbers<[1], [0], [0], [1], [0, 0, 1, 1], [], []>} : vector<8x8xf32>, vector<8x8xf32>, vector<8x8xf32> -> vector<8x8xf32>
    %c0_32 = arith.constant 0 : index
    %c0_33 = arith.constant 0 : index
    %42 = vector.load %arg13[%c0_32, %c0_33] : memref<8x32xf32, #tpu.memory_space<vmem>>, vector<8x32xf32>
    %c0_34 = arith.constant 0 : index
    %c0_35 = arith.constant 0 : index
    %c0_36 = arith.constant 0 : index
    %43 = vector.load %arg9[%c0_34, %c0_35, %c0_36] : memref<1x8x32xf32, #tpu.memory_space<vmem>>, vector<1x8x32xf32>
    %44 = vector.shape_cast %43 : vector<1x8x32xf32> to vector<8x32xf32>
    %cst_37 = arith.constant dense<0.000000e+00> : vector<8x32xf32>
    %45 = tpu.matmul %41, %44, %cst_37 {dimension_numbers = #tpu.dot_dimension_numbers<[1], [0], [0], [1], [0, 0, 1, 1], [], []>} : vector<8x8xf32>, vector<8x32xf32>, vector<8x32xf32> -> vector<8x32xf32>
    %46 = arith.addf %42, %45 : vector<8x32xf32>
    %c0_38 = arith.constant 0 : index
    %c0_39 = arith.constant 0 : index
    %47 = vector.load %arg13[%c0_38, %c0_39] : memref<8x32xf32, #tpu.memory_space<vmem>>, vector<8x32xf32>
    tpu.vector_store %arg13[%c0_38, %c0_39], %46 {strides = array<i32>} : memref<8x32xf32, #tpu.memory_space<vmem>>, vector<8x32xf32>,
    %c3_i32 = arith.constant 3 : i32
    %48 = arith.cmpi eq, %arg1, %c3_i32 : i32
    %49 = arith.extui %48 : i1 to i32
    %c0_i32_40 = arith.constant 0 : i32
    %50 = arith.cmpi ne, %49, %c0_i32_40 : i32
    scf.if %50 {
      %c0_41 = arith.constant 0 : index
      %c0_42 = arith.constant 0 : index
      %51 = vector.load %arg13[%c0_41, %c0_42] : memref<8x32xf32, #tpu.memory_space<vmem>>, vector<8x32xf32>
      %c0_43 = arith.constant 0 : index
      %c0_44 = arith.constant 0 : index
      %52 = vector.load %arg10[%c0_43, %c0_44] : memref<1x32xf32, #tpu.memory_space<vmem>>, vector<1x32xf32>
      %53 = vector.broadcast %52 : vector<1x32xf32> to vector<8x32xf32>
      %54 = arith.addf %51, %53 : vector<8x32xf32>
      %c0_45 = arith.constant 0 : index
      %c0_46 = arith.constant 0 : index
      %c0_47 = arith.constant 0 : index
      %55 = vector.load %arg11[%c0_45, %c0_46, %c0_47] : memref<1x8x32xf32, #tpu.memory_space<vmem>>, vector<1x8x32xf32>
      %56 = vector.shape_cast %55 : vector<1x8x32xf32> to vector<8x32xf32>
      %57 = vector.shape_cast %54 : vector<8x32xf32> to vector<1x8x32xf32>
      tpu.vector_store %arg11[%c0_45, %c0_46, %c0_47], %57 {strides = array<i32>} : memref<1x8x32xf32, #tpu.memory_space<vmem>>, vector<1x8x32xf32>,
    } else {
    }
    return
  }
  func.func @transform_0(%arg0: i32, %arg1: i32) -> (i32, i32, i32) {
    %c0_i32 = arith.constant 0 : i32
    %c0_i32_0 = arith.constant 0 : i32
    %c0_i32_1 = arith.constant 0 : i32
    return %arg0, %c0_i32, %c0_i32_0 : i32, i32, i32
  }
  func.func @transform_1(%arg0: i32, %arg1: i32) -> (i32, i32, i32) {
    %c0_i32 = arith.constant 0 : i32
    %c0_i32_0 = arith.constant 0 : i32
    %c0_i32_1 = arith.constant 0 : i32
    return %arg1, %c0_i32, %c0_i32_0 : i32, i32, i32
  }
  func.func @transform_2(%arg0: i32, %arg1: i32) -> (i32, i32, i32) {
    %c0_i32 = arith.constant 0 : i32
    %c0_i32_0 = arith.constant 0 : i32
    %c0_i32_1 = arith.constant 0 : i32
    return %arg1, %c0_i32, %c0_i32_0 : i32, i32, i32
  }
  func.func @transform_3(%arg0: i32, %arg1: i32) -> (i32, i32, i32) {
    %c0_i32 = arith.constant 0 : i32
    %c0_i32_0 = arith.constant 0 : i32
    %c0_i32_1 = arith.constant 0 : i32
    return %arg1, %c0_i32, %c0_i32_0 : i32, i32, i32
  }
  func.func @transform_4(%arg0: i32, %arg1: i32) -> (i32, i32, i32) {
    %c0_i32 = arith.constant 0 : i32
    %c0_i32_0 = arith.constant 0 : i32
    %c0_i32_1 = arith.constant 0 : i32
    return %arg1, %c0_i32, %c0_i32_0 : i32, i32, i32
  }
  func.func @transform_5(%arg0: i32, %arg1: i32) -> (i32, i32, i32) {
    %c0_i32 = arith.constant 0 : i32
    %c0_i32_0 = arith.constant 0 : i32
    %c0_i32_1 = arith.constant 0 : i32
    return %arg1, %c0_i32, %c0_i32_0 : i32, i32, i32
  }
  func.func @transform_6(%arg0: i32, %arg1: i32) -> (i32, i32, i32) {
    %c0_i32 = arith.constant 0 : i32
    %c0_i32_0 = arith.constant 0 : i32
    %c0_i32_1 = arith.constant 0 : i32
    return %arg1, %c0_i32, %c0_i32_0 : i32, i32, i32
  }
  func.func @transform_7(%arg0: i32, %arg1: i32) -> (i32, i32, i32) {
    %c0_i32 = arith.constant 0 : i32
    %c0_i32_0 = arith.constant 0 : i32
    %c0_i32_1 = arith.constant 0 : i32
    return %arg1, %c0_i32, %c0_i32_0 : i32, i32, i32
  }
  func.func @transform_8(%arg0: i32, %arg1: i32) -> (i32, i32) {
    %c0_i32 = arith.constant 0 : i32
    %c0_i32_0 = arith.constant 0 : i32
    %c0_i32_1 = arith.constant 0 : i32
    return %c0_i32, %c0_i32_0 : i32, i32
  }
  func.func @transform_9(%arg0: i32, %arg1: i32) -> (i32, i32, i32) {
    %c0_i32 = arith.constant 0 : i32
    %c0_i32_0 = arith.constant 0 : i32
    %c0_i32_1 = arith.constant 0 : i32
    return %arg0, %c0_i32, %c0_i32_0 : i32, i32, i32
  }
  func.func @transform_10(%arg0: i32, %arg1: i32) -> (i32, i32, i32, i32) {
    %c0_i32 = arith.constant 0 : i32
    %c0_i32_0 = arith.constant 0 : i32
    %c0_i32_1 = arith.constant 0 : i32
    return %arg0, %arg1, %c0_i32, %c0_i32_0 : i32, i32, i32, i32
  }
}

</mosaic_0001>

<llo_original>
// kernel: tpu_custom_call.1
$region0: #{tpu_custom_call.1}
  #allocation0 [shape = 'u32[]', space=smem, size = 0x4, offset = 0x4, fixed_abs, tag = 'smem constant byte address 0x4 - core index']
  #allocation1 [shape = 'u32[144,128]{1,0:T(1,128)}', space=vmem, size = 0x12000, scoped, tag = 'internal scratch']
  #allocation2 [shape = 'f32[8,32]{1,0:T(8,128)}', space=vmem, size = 0x1000, scoped, tag = 'scratch operand']
  %s0 = inlined_call_operand.vmem [shape: f32[2,8,32], index: 0, kind: input, shape index: {}]
  %s1 = inlined_call_operand.vmem [shape: f32[4,32,8], index: 1, kind: input, shape index: {}]
  %s2 = inlined_call_operand.vmem [shape: f32[4,32,8], index: 2, kind: input, shape index: {}]
  %s3 = inlined_call_operand.vmem [shape: f32[4,32,8], index: 3, kind: input, shape index: {}]
  %s4 = inlined_call_operand.vmem [shape: f32[4,1,8], index: 4, kind: input, shape index: {}]
  %s5 = inlined_call_operand.vmem [shape: f32[4,1,8], index: 5, kind: input, shape index: {}]
  %s6 = inlined_call_operand.vmem [shape: f32[4,1,8], index: 6, kind: input, shape index: {}]
  %s7 = inlined_call_operand.vmem [shape: f32[4,8,32], index: 7, kind: input, shape index: {}]
  %s8 = inlined_call_operand.vmem [shape: f32[1,32], index: 8, kind: input, shape index: {}]
  %s9 = inlined_call_operand.hbm [shape: f32[2,8,32], index: 9, kind: output, shape index: {0}]
  %s10 = inlined_call_operand.hbm [shape: f32[2,4,8,8], index: 10, kind: output, shape index: {1}]
  %11 = xla_tuple %s9, %s10
  %s12 = sld [smem:[#allocation0]]
  $region85: #{tpu_custom_call.1} parent=0
    _
  %s14 = ssub.s32 1, %s12
  %s15 = scalar_select 0, %s14, %s12
  $region1: #{tpu_custom_call.1} parent=0
    #allocation3 [shape = 'u8[8192]{0}', space=vmem, size = 0x2000, scoped, tag = 'output window, operand 0']
    #allocation4 [shape = 's32[2]{0}', space=sflag, size = 0x8, scoped, tag = 'scoped memory for tpu_custom_call.1']
    #allocation5 [shape = 'u8[8192]{0}', space=vmem, size = 0x2000, scoped, tag = 'output window, operand 1']
    #allocation6 [shape = 's32[2]{0}', space=sflag, size = 0x8, scoped, tag = 'scoped memory for tpu_custom_call.1']
    %16 = vsyncpa [#allocation4], 0
    %s17 = scalar_lea.sflag [#allocation4], 1
    %18 = vsyncpa %s17, 0
    %19 = vsyncpa [#allocation6], 0
    %s20 = scalar_lea.sflag [#allocation6], 1
    %21 = vsyncpa %s20, 0
    loop: start=0, step=1, limit=10
    $region2: #{tpu_custom_call.1} parent=1 // loop_pre_header
      _
    $region3: #{tpu_custom_call.1} parent=1 // loop_header
      %s23 = sphi 0, %s27
      %p24 = scmp.ge.s32.totalorder %s23, 10
      %s30 = sphi 0, %s42
      %s31 = sphi 0, %s38
      %s32 = sphi 0, %s30
      %s33 = sphi 0, %s31
      %s34 = sphi 0, %s32
      %s35 = sphi 0, %s33
      %s45 = sphi 0, %s47
      %s48 = sphi 0, %s45
      %s49 = sphi 0, %s48
      %s65 = sphi 0, %s49
      %s71 = sphi 0, %s73
      %s74 = sphi 0, %s71
      %s75 = sphi 0, %s74
      %s91 = sphi 0, %s75
      %s97 = sphi 0, %s99
      %s100 = sphi 0, %s97
      %s101 = sphi 0, %s100
      %s117 = sphi 0, %s101
      %s123 = sphi 0, %s125
      %s126 = sphi 0, %s123
      %s127 = sphi 0, %s126
      %s143 = sphi 0, %s127
      %s149 = sphi 0, %s151
      %s152 = sphi 0, %s149
      %s153 = sphi 0, %s152
      %s169 = sphi 0, %s153
      %s175 = sphi 0, %s177
      %s178 = sphi 0, %s175
      %s179 = sphi 0, %s178
      %s195 = sphi 0, %s179
      %s201 = sphi 0, %s203
      %s204 = sphi 0, %s201
      %s205 = sphi 0, %s204
      %s221 = sphi 0, %s205
      %s227 = sphi 0, %s229
      %s230 = sphi 0, %s227
      %s231 = sphi 0, %s230
      %s247 = sphi 0, %s231
      %s251 = sphi 0, %s251
      %s253 = sphi 0, %s251
      %s254 = sphi 0, %s253
      %s268 = sphi 0, %s254
      %s274 = sphi 0, %s276
      %s277 = sphi 0, %s274
      %s278 = sphi 0, %s277
      %s294 = sphi 0, %s278
      %s302 = sphi 0, %s304
      %s305 = sphi 0, %s302
      %s306 = sphi 0, %s305
      %s322 = sphi 0, %s306
    $region4: #{tpu_custom_call.1} parent=1 // loop_header_branch
      %26 = sbr.rel (%p24) target = $region8
    $region5: #{tpu_custom_call.1} parent=1 // loop_body
      %s28 = ssub.s32 %s23, 1
      %s29 = ssub.s32 %s23, 2
      %s36 = sadd.s32 1, %s31
      %p37 = scmp.ge.s32.totalorder %s36, 4
      %s38 = scalar_select %p37, 0, %s36
      %s39 = sadd.s32 1, %s30
      %s40 = scalar_select %p37, %s39, %s30
      %p41 = scmp.ge.s32.totalorder %s40, 2
      %s42 = scalar_select %p41, 0, %s40
      %s43 = ssub.s32 %s30, %s42
      %p44 = scmp.eq.s32.totalorder %s43, 0
      %s46 = sadd.s32 %s45, 1
      %s47 = scalar_select %p44, %s45, %s46
      %p50 = pneg %p44
      %p51 = scmp.eq.s32.totalorder %s23, 7
      %p52 = por %p50, %p51
      %p53 = scmp.ne.s32.totalorder %s45, %s48
      %p54 = scmp.eq.s32.totalorder %s23, 0
      %p55 = por %p53, %p54
      %p56 = scmp.ne.s32.totalorder %s45, %s48
      %p57 = scmp.eq.s32.totalorder %s28, 7
      %p58 = por %p56, %p57
      %p59 = scmp.ne.s32.totalorder %s48, %s49
      %p60 = scmp.eq.s32.totalorder %s28, 0
      %p61 = por %p59, %p60
      %p62 = scmp.ne.s32.totalorder %s48, %s49
      %p63 = scmp.eq.s32.totalorder %s29, 7
      %p64 = por %p62, %p63
      %p66 = scmp.ne.s32.totalorder %s49, %s65
      %p67 = scmp.eq.s32.totalorder %s29, 0
      %p68 = por %p66, %p67
      %s69 = ssub.s32 %s31, %s38
      %p70 = scmp.eq.s32.totalorder %s69, 0
      %s72 = sadd.s32 %s71, 1
      %s73 = scalar_select %p70, %s71, %s72
      %p76 = pneg %p70
      %p77 = scmp.eq.s32.totalorder %s23, 7
      %p78 = por %p76, %p77
      %p79 = scmp.ne.s32.totalorder %s71, %s74
      %p80 = scmp.eq.s32.totalorder %s23, 0
      %p81 = por %p79, %p80
      %p82 = scmp.ne.s32.totalorder %s71, %s74
      %p83 = scmp.eq.s32.totalorder %s28, 7
      %p84 = por %p82, %p83
      %p85 = scmp.ne.s32.totalorder %s74, %s75
      %p86 = scmp.eq.s32.totalorder %s28, 0
      %p87 = por %p85, %p86
      %p88 = scmp.ne.s32.totalorder %s74, %s75
      %p89 = scmp.eq.s32.totalorder %s29, 7
      %p90 = por %p88, %p89
      %p92 = scmp.ne.s32.totalorder %s75, %s91
      %p93 = scmp.eq.s32.totalorder %s29, 0
      %p94 = por %p92, %p93
      %s95 = ssub.s32 %s31, %s38
      %p96 = scmp.eq.s32.totalorder %s95, 0
      %s98 = sadd.s32 %s97, 1
      %s99 = scalar_select %p96, %s97, %s98
      %p102 = pneg %p96
      %p103 = scmp.eq.s32.totalorder %s23, 7
      %p104 = por %p102, %p103
      %p105 = scmp.ne.s32.totalorder %s97, %s100
      %p106 = scmp.eq.s32.totalorder %s23, 0
      %p107 = por %p105, %p106
      %p108 = scmp.ne.s32.totalorder %s97, %s100
      %p109 = scmp.eq.s32.totalorder %s28, 7
      %p110 = por %p108, %p109
      %p111 = scmp.ne.s32.totalorder %s100, %s101
      %p112 = scmp.eq.s32.totalorder %s28, 0
      %p113 = por %p111, %p112
      %p114 = scmp.ne.s32.totalorder %s100, %s101
      %p115 = scmp.eq.s32.totalorder %s29, 7
      %p116 = por %p114, %p115
      %p118 = scmp.ne.s32.totalorder %s101, %s117
      %p119 = scmp.eq.s32.totalorder %s29, 0
      %p120 = por %p118, %p119
      %s121 = ssub.s32 %s31, %s38
      %p122 = scmp.eq.s32.totalorder %s121, 0
      %s124 = sadd.s32 %s123, 1
      %s125 = scalar_select %p122, %s123, %s124
      %p128 = pneg %p122
      %p129 = scmp.eq.s32.totalorder %s23, 7
      %p130 = por %p128, %p129
      %p131 = scmp.ne.s32.totalorder %s123, %s126
      %p132 = scmp.eq.s32.totalorder %s23, 0
      %p133 = por %p131, %p132
      %p134 = scmp.ne.s32.totalorder %s123, %s126
      %p135 = scmp.eq.s32.totalorder %s28, 7
      %p136 = por %p134, %p135
      %p137 = scmp.ne.s32.totalorder %s126, %s127
      %p138 = scmp.eq.s32.totalorder %s28, 0
      %p139 = por %p137, %p138
      %p140 = scmp.ne.s32.totalorder %s126, %s127
      %p141 = scmp.eq.s32.totalorder %s29, 7
      %p142 = por %p140, %p141
      %p144 = scmp.ne.s32.totalorder %s127, %s143
      %p145 = scmp.eq.s32.totalorder %s29, 0
      %p146 = por %p144, %p145
      %s147 = ssub.s32 %s31, %s38
      %p148 = scmp.eq.s32.totalorder %s147, 0
      %s150 = sadd.s32 %s149, 1
      %s151 = scalar_select %p148, %s149, %s150
      %p154 = pneg %p148
      %p155 = scmp.eq.s32.totalorder %s23, 7
      %p156 = por %p154, %p155
      %p157 = scmp.ne.s32.totalorder %s149, %s152
      %p158 = scmp.eq.s32.totalorder %s23, 0
      %p159 = por %p157, %p158
      %p160 = scmp.ne.s32.totalorder %s149, %s152
      %p161 = scmp.eq.s32.totalorder %s28, 7
      %p162 = por %p160, %p161
      %p163 = scmp.ne.s32.totalorder %s152, %s153
      %p164 = scmp.eq.s32.totalorder %s28, 0
      %p165 = por %p163, %p164
      %p166 = scmp.ne.s32.totalorder %s152, %s153
      %p167 = scmp.eq.s32.totalorder %s29, 7
      %p168 = por %p166, %p167
      %p170 = scmp.ne.s32.totalorder %s153, %s169
      %p171 = scmp.eq.s32.totalorder %s29, 0
      %p172 = por %p170, %p171
      %s173 = ssub.s32 %s31, %s38
      %p174 = scmp.eq.s32.totalorder %s173, 0
      %s176 = sadd.s32 %s175, 1
      %s177 = scalar_select %p174, %s175, %s176
      %p180 = pneg %p174
      %p181 = scmp.eq.s32.totalorder %s23, 7
      %p182 = por %p180, %p181
      %p183 = scmp.ne.s32.totalorder %s175, %s178
      %p184 = scmp.eq.s32.totalorder %s23, 0
      %p185 = por %p183, %p184
      %p186 = scmp.ne.s32.totalorder %s175, %s178
      %p187 = scmp.eq.s32.totalorder %s28, 7
      %p188 = por %p186, %p187
      %p189 = scmp.ne.s32.totalorder %s178, %s179
      %p190 = scmp.eq.s32.totalorder %s28, 0
      %p191 = por %p189, %p190
      %p192 = scmp.ne.s32.totalorder %s178, %s179
      %p193 = scmp.eq.s32.totalorder %s29, 7
      %p194 = por %p192, %p193
      %p196 = scmp.ne.s32.totalorder %s179, %s195
      %p197 = scmp.eq.s32.totalorder %s29, 0
      %p198 = por %p196, %p197
      %s199 = ssub.s32 %s31, %s38
      %p200 = scmp.eq.s32.totalorder %s199, 0
      %s202 = sadd.s32 %s201, 1
      %s203 = scalar_select %p200, %s201, %s202
      %p206 = pneg %p200
      %p207 = scmp.eq.s32.totalorder %s23, 7
      %p208 = por %p206, %p207
      %p209 = scmp.ne.s32.totalorder %s201, %s204
      %p210 = scmp.eq.s32.totalorder %s23, 0
      %p211 = por %p209, %p210
      %p212 = scmp.ne.s32.totalorder %s201, %s204
      %p213 = scmp.eq.s32.totalorder %s28, 7
      %p214 = por %p212, %p213
      %p215 = scmp.ne.s32.totalorder %s204, %s205
      %p216 = scmp.eq.s32.totalorder %s28, 0
      %p217 = por %p215, %p216
      %p218 = scmp.ne.s32.totalorder %s204, %s205
      %p219 = scmp.eq.s32.totalorder %s29, 7
      %p220 = por %p218, %p219
      %p222 = scmp.ne.s32.totalorder %s205, %s221
      %p223 = scmp.eq.s32.totalorder %s29, 0
      %p224 = por %p222, %p223
      %s225 = ssub.s32 %s31, %s38
      %p226 = scmp.eq.s32.totalorder %s225, 0
      %s228 = sadd.s32 %s227, 1
      %s229 = scalar_select %p226, %s227, %s228
      %p232 = pneg %p226
      %p233 = scmp.eq.s32.totalorder %s23, 7
      %p234 = por %p232, %p233
      %p235 = scmp.ne.s32.totalorder %s227, %s230
      %p236 = scmp.eq.s32.totalorder %s23, 0
      %p237 = por %p235, %p236
      %p238 = scmp.ne.s32.totalorder %s227, %s230
      %p239 = scmp.eq.s32.totalorder %s28, 7
      %p240 = por %p238, %p239
      %p241 = scmp.ne.s32.totalorder %s230, %s231
      %p242 = scmp.eq.s32.totalorder %s28, 0
      %p243 = por %p241, %p242
      %p244 = scmp.ne.s32.totalorder %s230, %s231
      %p245 = scmp.eq.s32.totalorder %s29, 7
      %p246 = por %p244, %p245
      %p248 = scmp.ne.s32.totalorder %s231, %s247
      %p249 = scmp.eq.s32.totalorder %s29, 0
      %p250 = por %p248, %p249
      %s252 = sadd.s32 %s251, 1
      %p255 = scmp.eq.s32.totalorder %s23, 7
      %p256 = scmp.ne.s32.totalorder %s251, %s253
      %p257 = scmp.eq.s32.totalorder %s23, 0
      %p258 = por %p256, %p257
      %p259 = scmp.ne.s32.totalorder %s251, %s253
      %p260 = scmp.eq.s32.totalorder %s28, 7
      %p261 = por %p259, %p260
      %p262 = scmp.ne.s32.totalorder %s253, %s254
      %p263 = scmp.eq.s32.totalorder %s28, 0
      %p264 = por %p262, %p263
      %p265 = scmp.ne.s32.totalorder %s253, %s254
      %p266 = scmp.eq.s32.totalorder %s29, 7
      %p267 = por %p265, %p266
      %p269 = scmp.ne.s32.totalorder %s254, %s268
      %p270 = scmp.eq.s32.totalorder %s29, 0
      %p271 = por %p269, %p270
      %s272 = ssub.s32 %s30, %s42
      %p273 = scmp.eq.s32.totalorder %s272, 0
      %s275 = sadd.s32 %s274, 1
      %s276 = scalar_select %p273, %s274, %s275
      %p279 = pneg %p273
      %p280 = scmp.eq.s32.totalorder %s23, 7
      %p281 = por %p279, %p280
      %p282 = scmp.ne.s32.totalorder %s274, %s277
      %p283 = scmp.eq.s32.totalorder %s23, 0
      %p284 = por %p282, %p283
      %p285 = scmp.ne.s32.totalorder %s274, %s277
      %p286 = scmp.eq.s32.totalorder %s28, 7
      %p287 = por %p285, %p286
      %p288 = scmp.ne.s32.totalorder %s277, %s278
      %p289 = scmp.eq.s32.totalorder %s28, 0
      %p290 = por %p288, %p289
      %p291 = scmp.ne.s32.totalorder %s277, %s278
      %p292 = scmp.eq.s32.totalorder %s29, 7
      %p293 = por %p291, %p292
      %p295 = scmp.ne.s32.totalorder %s278, %s294
      %p296 = scmp.eq.s32.totalorder %s29, 0
      %p297 = por %p295, %p296
      %s298 = ssub.s32 %s30, %s42
      %s299 = ssub.s32 %s31, %s38
      %s300 = sor.u32 %s298, %s299
      %p301 = scmp.eq.s32.totalorder %s300, 0
      %s303 = sadd.s32 %s302, 1
      %s304 = scalar_select %p301, %s302, %s303
      %p307 = pneg %p301
      %p308 = scmp.eq.s32.totalorder %s23, 7
      %p309 = por %p307, %p308
      %p310 = scmp.ne.s32.totalorder %s302, %s305
      %p311 = scmp.eq.s32.totalorder %s23, 0
      %p312 = por %p310, %p311
      %p313 = scmp.ne.s32.totalorder %s302, %s305
      %p314 = scmp.eq.s32.totalorder %s28, 7
      %p315 = por %p313, %p314
      %p316 = scmp.ne.s32.totalorder %s305, %s306
      %p317 = scmp.eq.s32.totalorder %s28, 0
      %p318 = por %p316, %p317
      %p319 = scmp.ne.s32.totalorder %s305, %s306
      %p320 = scmp.eq.s32.totalorder %s29, 7
      %p321 = por %p319, %p320
      %p323 = scmp.ne.s32.totalorder %s306, %s322
      %p324 = scmp.eq.s32.totalorder %s29, 0
      %p325 = por %p323, %p324
      %p326 = scmp.le.s32.totalorder 1, %s23
      %p327 = scmp.lt.s32.totalorder %s23, 9
      %p328 = pnand %p326, %p327
      %p329 = pneg %p328
      // Predicated region
      $region9: #{tpu_custom_call.1} parent=5 // pred_check
        _
      $region10: #{tpu_custom_call.1} parent=5 // pred_check_branch
        %331 = sbr.rel (%p328) target = $region12
      $region11: #{tpu_custom_call.1} parent=5 // pred_region
        %s332 = ssub.s32 %s23, 1
        // Predicated region
        $region13: #{tpu_custom_call.1} parent=11 // pred_check
          %p333 = pneg %p264
        $region14: #{tpu_custom_call.1} parent=11 // pred_check_branch
          %335 = sbr.rel (%p333) target = $region16
        $region15: #{tpu_custom_call.1} parent=11 // pred_region
          _
        $region16: #{tpu_custom_call.1} parent=11 // pred_fallthru
          _
      $region12: #{tpu_custom_call.1} parent=5 // pred_fallthru
        _
      %p336 = scmp.lt.s32.totalorder %s23, 8
      // Predicated region
      $region17: #{tpu_custom_call.1} parent=5 // pred_check
        %p337 = pneg %p336
      $region18: #{tpu_custom_call.1} parent=5 // pred_check_branch
        %339 = sbr.rel (%p337) target = $region20
      $region19: #{tpu_custom_call.1} parent=5 // pred_region
        // Predicated region
        $region21: #{tpu_custom_call.1} parent=19 // pred_check
          %p340 = pneg %p55
        $region22: #{tpu_custom_call.1} parent=19 // pred_check_branch
          %342 = sbr.rel (%p340) target = $region24
        $region23: #{tpu_custom_call.1} parent=19 // pred_region
          %p343 = scmp.lt.s32.totalorder %s30, 1
          %s344 = scalar_select %p343, %s30, 1
          %s345 = smul.addr %s344, 8
          %s346 = scalar_lea.vmem %s0, %s345
        $region24: #{tpu_custom_call.1} parent=19 // pred_fallthru
          _
        // Predicated region
        $region25: #{tpu_custom_call.1} parent=19 // pred_check
          %p347 = pneg %p81
        $region26: #{tpu_custom_call.1} parent=19 // pred_check_branch
          %349 = sbr.rel (%p347) target = $region28
        $region27: #{tpu_custom_call.1} parent=19 // pred_region
          %p350 = scmp.lt.s32.totalorder %s31, 3
          %s351 = scalar_select %p350, %s31, 3
          %s352 = smul.addr %s351, 4
          %s353 = smul.addr %s352, 8
          %s354 = scalar_lea.vmem %s1, %s353
        $region28: #{tpu_custom_call.1} parent=19 // pred_fallthru
          _
        // Predicated region
        $region29: #{tpu_custom_call.1} parent=19 // pred_check
          %p355 = pneg %p107
        $region30: #{tpu_custom_call.1} parent=19 // pred_check_branch
          %357 = sbr.rel (%p355) target = $region32
        $region31: #{tpu_custom_call.1} parent=19 // pred_region
          %p358 = scmp.lt.s32.totalorder %s31, 3
          %s359 = scalar_select %p358, %s31, 3
          %s360 = smul.addr %s359, 4
          %s361 = smul.addr %s360, 8
          %s362 = scalar_lea.vmem %s2, %s361
        $region32: #{tpu_custom_call.1} parent=19 // pred_fallthru
          _
        // Predicated region
        $region33: #{tpu_custom_call.1} parent=19 // pred_check
          %p363 = pneg %p133
        $region34: #{tpu_custom_call.1} parent=19 // pred_check_branch
          %365 = sbr.rel (%p363) target = $region36
        $region35: #{tpu_custom_call.1} parent=19 // pred_region
          %p366 = scmp.lt.s32.totalorder %s31, 3
          %s367 = scalar_select %p366, %s31, 3
          %s368 = smul.addr %s367, 4
          %s369 = smul.addr %s368, 8
          %s370 = scalar_lea.vmem %s3, %s369
        $region36: #{tpu_custom_call.1} parent=19 // pred_fallthru
          _
        // Predicated region
        $region37: #{tpu_custom_call.1} parent=19 // pred_check
          %p371 = pneg %p159
        $region38: #{tpu_custom_call.1} parent=19 // pred_check_branch
          %373 = sbr.rel (%p371) target = $region40
        $region39: #{tpu_custom_call.1} parent=19 // pred_region
          %p374 = scmp.lt.s32.totalorder %s31, 3
          %s375 = scalar_select %p374, %s31, 3
          %s376 = scalar_lea.vmem %s4, %s375
        $region40: #{tpu_custom_call.1} parent=19 // pred_fallthru
          _
        // Predicated region
        $region41: #{tpu_custom_call.1} parent=19 // pred_check
          %p377 = pneg %p185
        $region42: #{tpu_custom_call.1} parent=19 // pred_check_branch
          %379 = sbr.rel (%p377) target = $region44
        $region43: #{tpu_custom_call.1} parent=19 // pred_region
          %p380 = scmp.lt.s32.totalorder %s31, 3
          %s381 = scalar_select %p380, %s31, 3
          %s382 = scalar_lea.vmem %s5, %s381
        $region44: #{tpu_custom_call.1} parent=19 // pred_fallthru
          _
        // Predicated region
        $region45: #{tpu_custom_call.1} parent=19 // pred_check
          %p383 = pneg %p211
        $region46: #{tpu_custom_call.1} parent=19 // pred_check_branch
          %385 = sbr.rel (%p383) target = $region48
        $region47: #{tpu_custom_call.1} parent=19 // pred_region
          %p386 = scmp.lt.s32.totalorder %s31, 3
          %s387 = scalar_select %p386, %s31, 3
          %s388 = scalar_lea.vmem %s6, %s387
        $region48: #{tpu_custom_call.1} parent=19 // pred_fallthru
          _
        // Predicated region
        $region49: #{tpu_custom_call.1} parent=19 // pred_check
          %p389 = pneg %p237
        $region50: #{tpu_custom_call.1} parent=19 // pred_check_branch
          %391 = sbr.rel (%p389) target = $region52
        $region51: #{tpu_custom_call.1} parent=19 // pred_region
          %p392 = scmp.lt.s32.totalorder %s31, 3
          %s393 = scalar_select %p392, %s31, 3
          %s394 = smul.addr %s393, 8
          %s395 = scalar_lea.vmem %s7, %s394
        $region52: #{tpu_custom_call.1} parent=19 // pred_fallthru
          _
      $region20: #{tpu_custom_call.1} parent=5 // pred_fallthru
        _
      %p396 = scmp.le.s32.totalorder 1, %s23
      %p397 = scmp.lt.s32.totalorder %s23, 9
      %p398 = pnand %p396, %p397
      %p399 = pneg %p398
      // Predicated region
      $region53: #{tpu_custom_call.1} parent=5 // pred_check
        _
      $region54: #{tpu_custom_call.1} parent=5 // pred_check_branch
        %401 = sbr.rel (%p398) target = $region56
      $region55: #{tpu_custom_call.1} parent=5 // pred_region
        %s402 = ssub.s32 %s23, 1
        %p403 = scmp.lt.s32.totalorder %s32, 1
        %s404 = scalar_select %p403, %s32, 1
        %s405 = smul.addr %s404, 8
        %s406 = scalar_lea.vmem %s0, %s405
        %p407 = pneg %p61
        %p408 = pneg %p58
        %p409 = scmp.lt.s32.totalorder %s33, 3
        %s410 = scalar_select %p409, %s33, 3
        %s411 = smul.addr %s410, 4
        %s412 = smul.addr %s411, 8
        %s413 = scalar_lea.vmem %s1, %s412
        %p414 = pneg %p87
        %p415 = pneg %p84
        %p416 = scmp.lt.s32.totalorder %s33, 3
        %s417 = scalar_select %p416, %s33, 3
        %s418 = smul.addr %s417, 4
        %s419 = smul.addr %s418, 8
        %s420 = scalar_lea.vmem %s2, %s419
        %p421 = pneg %p113
        %p422 = pneg %p110
        %p423 = scmp.lt.s32.totalorder %s33, 3
        %s424 = scalar_select %p423, %s33, 3
        %s425 = smul.addr %s424, 4
        %s426 = smul.addr %s425, 8
        %s427 = scalar_lea.vmem %s3, %s426
        %p428 = pneg %p139
        %p429 = pneg %p136
        %p430 = scmp.lt.s32.totalorder %s33, 3
        %s431 = scalar_select %p430, %s33, 3
        %s432 = scalar_lea.vmem %s4, %s431
        %p433 = pneg %p165
        %p434 = pneg %p162
        %p435 = scmp.lt.s32.totalorder %s33, 3
        %s436 = scalar_select %p435, %s33, 3
        %s437 = scalar_lea.vmem %s5, %s436
        %p438 = pneg %p191
        %p439 = pneg %p188
        %p440 = scmp.lt.s32.totalorder %s33, 3
        %s441 = scalar_select %p440, %s33, 3
        %s442 = scalar_lea.vmem %s6, %s441
        %p443 = pneg %p217
        %p444 = pneg %p214
        %p445 = scmp.lt.s32.totalorder %s33, 3
        %s446 = scalar_select %p445, %s33, 3
        %s447 = smul.addr %s446, 8
        %s448 = scalar_lea.vmem %s7, %s447
        %p449 = pneg %p243
        %p450 = pneg %p240
        %p451 = pneg %p264
        %p452 = pneg %p261
        %p453 = pneg %p290
        %p454 = pneg %p287
        %s455 = sand.u32 %s277, 1
        %s456 = scalar_lea.sflag [#allocation4], %s455
        %s457 = sand.u32 %s277, 1
        %s458 = smul.addr %s457, 8
        %s459 = scalar_lea.vmem [#allocation3], %s458
        %p460 = pneg %p318
        %p461 = pneg %p315
        %s462 = sand.u32 %s305, 1
        %s463 = scalar_lea.sflag [#allocation6], %s462
        %s464 = sand.u32 %s305, 1
        %s465 = smul.addr %s464, 8
        %s466 = scalar_lea.vmem [#allocation5], %s465
        %p467 = scmp.lt.s32.totalorder %s32, 1
        %s468 = scalar_select %p467, %s32, 1
        %s469 = smul.addr %s468, 8
        %s470 = scalar_lea.vmem %s0, %s469
        %p471 = scmp.lt.s32.totalorder %s33, 3
        %s472 = scalar_select %p471, %s33, 3
        %s473 = smul.addr %s472, 4
        %s474 = smul.addr %s473, 8
        %s475 = scalar_lea.vmem %s1, %s474
        %p476 = scmp.lt.s32.totalorder %s33, 3
        %s477 = scalar_select %p476, %s33, 3
        %s478 = smul.addr %s477, 4
        %s479 = smul.addr %s478, 8
        %s480 = scalar_lea.vmem %s2, %s479
        %p481 = scmp.lt.s32.totalorder %s33, 3
        %s482 = scalar_select %p481, %s33, 3
        %s483 = smul.addr %s482, 4
        %s484 = smul.addr %s483, 8
        %s485 = scalar_lea.vmem %s3, %s484
        %p486 = scmp.lt.s32.totalorder %s33, 3
        %s487 = scalar_select %p486, %s33, 3
        %s488 = scalar_lea.vmem %s4, %s487
        %p489 = scmp.lt.s32.totalorder %s33, 3
        %s490 = scalar_select %p489, %s33, 3
        %s491 = scalar_lea.vmem %s5, %s490
        %p492 = scmp.lt.s32.totalorder %s33, 3
        %s493 = scalar_select %p492, %s33, 3
        %s494 = scalar_lea.vmem %s6, %s493
        %p495 = scmp.lt.s32.totalorder %s33, 3
        %s496 = scalar_select %p495, %s33, 3
        %s497 = smul.addr %s496, 8
        %s498 = scalar_lea.vmem %s7, %s497
        %p499 = scmp.eq.s32.totalorder %s33, 0
        // Predicated region
        $region57: #{tpu_custom_call.1} parent=55 // pred_check
          %p500 = pneg %p499
        $region58: #{tpu_custom_call.1} parent=55 // pred_check_branch
          %502 = sbr.rel (%p500) target = $region60
        $region59: #{tpu_custom_call.1} parent=55 // pred_region
          %vm503 = vcmask 261120
          %504 = vst.msk [vmem:[#allocation2] sm:$0xff] %vm503, 0.0
        $region60: #{tpu_custom_call.1} parent=55 // pred_fallthru
          _
        %v505 = vld [vmem:[%s470] sm:$0xff]
        %v506 = vld [vmem:[%s475] sm:$0xff]
        %v507 = vld [vmem:[%s475 + $0x8] sm:$0xff]
        %v508 = vld [vmem:[%s475 + $0x10] sm:$0xff]
        %v509 = vld [vmem:[%s475 + $0x18] sm:$0xff]
        %v510 = vld [vmem:[%s488] sm:$0x1]
        %v512 = vlaneseq
        %v513 = vshrl.u32 %v512, 7
        %v514 = vsub.s32 0, %v513
        %v515 = vrot.slane %v510, %v514
        %vm517 = vcmask 261120
        %v519 = vsel %vm517, %v505, 0
        %521 = vmatprep.subr.mxu0 0.0
        %522 = vmatpush1.msra.mxu0 0.0
        %523 = vmatprep.subr.mxu0 0.0
        %524 = vmatpush1.msra.mxu0 0.0
        %525 = vmatprep.subr.mxu0 0.0
        %526 = vmatpush1.msra.mxu0 0.0
        %527 = vmatprep.subr.mxu0 0.0
        %528 = vmatpush1.msra.mxu0 0.0
        %529 = vmatprep.subr.mxu0 0.0
        %530 = vmatpush1.msra.mxu0 0.0
        %531 = vmatprep.subr.mxu0 0.0
        %532 = vmatpush1.msra.mxu0 0.0
        %533 = vmatprep.subr.mxu0 0.0
        %534 = vmatpush1.msra.mxu0 0.0
        %535 = vmatprep.subr.mxu0 0.0
        %536 = vmatpush1.msra.mxu0 0.0
        %537 = vmatprep.subr.mxu0 0.0
        %538 = vmatpush1.msra.mxu0 0.0
        %539 = vmatprep.subr.mxu0 0.0
        %540 = vmatpush1.msra.mxu0 0.0
        %541 = vmatprep.subr.mxu0 0.0
        %542 = vmatpush1.msra.mxu0 0.0
        %543 = vmatprep.subr.mxu0 0.0
        %544 = vmatpush1.msra.mxu0 0.0
        %545 = vmatprep.subr.mxu0 0.0
        %546 = vmatpush1.msra.mxu0 %v509
        %547 = vmatprep.subr.mxu0 0.0
        %548 = vmatpush1.msra.mxu0 %v508
        %549 = vmatprep.subr.mxu0 0.0
        %550 = vmatpush1.msra.mxu0 %v507
        %551 = vmatprep.subr.mxu0 0.0
        %552 = vmatpush1.msra.mxu0 %v506
        %553 = vmatprep.subr.mxu0 0.0
        %554 = vmatpush2.msra.mxu0 0.0
        %555 = vmatprep.subr.mxu0 0.0
        %556 = vmatpush2.msra.mxu0 0.0
        %557 = vmatprep.subr.mxu0 0.0
        %558 = vmatpush2.msra.mxu0 0.0
        %559 = vmatprep.subr.mxu0 0.0
        %560 = vmatpush2.msra.mxu0 0.0
        %561 = vmatprep.subr.mxu0 0.0
        %562 = vmatpush2.msra.mxu0 0.0
        %563 = vmatprep.subr.mxu0 0.0
        %564 = vmatpush2.msra.mxu0 0.0
        %565 = vmatprep.subr.mxu0 0.0
        %566 = vmatpush2.msra.mxu0 0.0
        %567 = vmatprep.subr.mxu0 0.0
        %568 = vmatpush2.msra.mxu0 0.0
        %569 = vmatprep.subr.mxu0 0.0
        %570 = vmatpush2.msra.mxu0 0.0
        %571 = vmatprep.subr.mxu0 0.0
        %572 = vmatpush2.msra.mxu0 0.0
        %573 = vmatprep.subr.mxu0 0.0
        %574 = vmatpush2.msra.mxu0 0.0
        %575 = vmatprep.subr.mxu0 0.0
        %576 = vmatpush2.msra.mxu0 0.0
        %577 = vmatprep.subr.mxu0 0.0
        %578 = vmatpush2.msra.mxu0 0.0
        %579 = vmatprep.subr.mxu0 0.0
        %580 = vmatpush2.msra.mxu0 0.0
        %581 = vmatprep.subr.mxu0 0.0
        %582 = vmatpush2.msra.mxu0 0.0
        %583 = vmatprep.subr.mxu0 0.0
        %584 = vmatpush2.msra.mxu0 0.0
        %585 = vmatprep.mubr.f32.mxu0 0.0
        %586 = vmatmul.mubr.f32.gmra.mxu0 %v519
        %v587 = vpop.f32.mrf.mxu0
        %v588 = vadd.f32 %v515, %v587
        %v589 = vpop.f32.mrf.mxu0
        %590 = vdwg.mxu0
        %v591 = vld [vmem:[%s480] sm:$0xff]
        %v592 = vld [vmem:[%s480 + $0x8] sm:$0xff]
        %v593 = vld [vmem:[%s480 + $0x10] sm:$0xff]
        %v594 = vld [vmem:[%s480 + $0x18] sm:$0xff]
        %v595 = vld [vmem:[%s491] sm:$0x1]
        %v597 = vlaneseq
        %v598 = vshrl.u32 %v597, 7
        %v599 = vsub.s32 0, %v598
        %v600 = vrot.slane %v595, %v599
        %602 = vmatprep.subr.mxu0 0.0
        %603 = vmatpush1.msra.mxu0 0.0
        %604 = vmatprep.subr.mxu0 0.0
        %605 = vmatpush1.msra.mxu0 0.0
        %606 = vmatprep.subr.mxu0 0.0
        %607 = vmatpush1.msra.mxu0 0.0
        %608 = vmatprep.subr.mxu0 0.0
        %609 = vmatpush1.msra.mxu0 0.0
        %610 = vmatprep.subr.mxu0 0.0
        %611 = vmatpush1.msra.mxu0 0.0
        %612 = vmatprep.subr.mxu0 0.0
        %613 = vmatpush1.msra.mxu0 0.0
        %614 = vmatprep.subr.mxu0 0.0
        %615 = vmatpush1.msra.mxu0 0.0
        %616 = vmatprep.subr.mxu0 0.0
        %617 = vmatpush1.msra.mxu0 0.0
        %618 = vmatprep.subr.mxu0 0.0
        %619 = vmatpush1.msra.mxu0 0.0
        %620 = vmatprep.subr.mxu0 0.0
        %621 = vmatpush1.msra.mxu0 0.0
        %622 = vmatprep.subr.mxu0 0.0
        %623 = vmatpush1.msra.mxu0 0.0
        %624 = vmatprep.subr.mxu0 0.0
        %625 = vmatpush1.msra.mxu0 0.0
        %626 = vmatprep.subr.mxu0 0.0
        %627 = vmatpush1.msra.mxu0 %v594
        %628 = vmatprep.subr.mxu0 0.0
        %629 = vmatpush1.msra.mxu0 %v593
        %630 = vmatprep.subr.mxu0 0.0
        %631 = vmatpush1.msra.mxu0 %v592
        %632 = vmatprep.subr.mxu0 0.0
        %633 = vmatpush1.msra.mxu0 %v591
        %634 = vmatprep.subr.mxu0 0.0
        %635 = vmatpush2.msra.mxu0 0.0
        %636 = vmatprep.subr.mxu0 0.0
        %637 = vmatpush2.msra.mxu0 0.0
        %638 = vmatprep.subr.mxu0 0.0
        %639 = vmatpush2.msra.mxu0 0.0
        %640 = vmatprep.subr.mxu0 0.0
        %641 = vmatpush2.msra.mxu0 0.0
        %642 = vmatprep.subr.mxu0 0.0
        %643 = vmatpush2.msra.mxu0 0.0
        %644 = vmatprep.subr.mxu0 0.0
        %645 = vmatpush2.msra.mxu0 0.0
        %646 = vmatprep.subr.mxu0 0.0
        %647 = vmatpush2.msra.mxu0 0.0
        %648 = vmatprep.subr.mxu0 0.0
        %649 = vmatpush2.msra.mxu0 0.0
        %650 = vmatprep.subr.mxu0 0.0
        %651 = vmatpush2.msra.mxu0 0.0
        %652 = vmatprep.subr.mxu0 0.0
        %653 = vmatpush2.msra.mxu0 0.0
        %654 = vmatprep.subr.mxu0 0.0
        %655 = vmatpush2.msra.mxu0 0.0
        %656 = vmatprep.subr.mxu0 0.0
        %657 = vmatpush2.msra.mxu0 0.0
        %658 = vmatprep.subr.mxu0 0.0
        %659 = vmatpush2.msra.mxu0 0.0
        %660 = vmatprep.subr.mxu0 0.0
        %661 = vmatpush2.msra.mxu0 0.0
        %662 = vmatprep.subr.mxu0 0.0
        %663 = vmatpush2.msra.mxu0 0.0
        %664 = vmatprep.subr.mxu0 0.0
        %665 = vmatpush2.msra.mxu0 0.0
        %666 = vmatprep.mubr.f32.mxu0 0.0
        %667 = vmatmul.mubr.f32.gmra.mxu0 %v519
        %v668 = vpop.f32.mrf.mxu0
        %v669 = vadd.f32 %v600, %v668
        %v670 = vpop.f32.mrf.mxu0
        %671 = vdwg.mxu0
        %v672 = vld [vmem:[%s485] sm:$0xff]
        %v673 = vld [vmem:[%s485 + $0x8] sm:$0xff]
        %v674 = vld [vmem:[%s485 + $0x10] sm:$0xff]
        %v675 = vld [vmem:[%s485 + $0x18] sm:$0xff]
        %v676 = vld [vmem:[%s494] sm:$0x1]
        %v678 = vlaneseq
        %v679 = vshrl.u32 %v678, 7
        %v680 = vsub.s32 0, %v679
        %v681 = vrot.slane %v676, %v680
        %683 = vmatprep.subr.mxu0 0.0
        %684 = vmatpush1.msra.mxu0 0.0
        %685 = vmatprep.subr.mxu0 0.0
        %686 = vmatpush1.msra.mxu0 0.0
        %687 = vmatprep.subr.mxu0 0.0
        %688 = vmatpush1.msra.mxu0 0.0
        %689 = vmatprep.subr.mxu0 0.0
        %690 = vmatpush1.msra.mxu0 0.0
        %691 = vmatprep.subr.mxu0 0.0
        %692 = vmatpush1.msra.mxu0 0.0
        %693 = vmatprep.subr.mxu0 0.0
        %694 = vmatpush1.msra.mxu0 0.0
        %695 = vmatprep.subr.mxu0 0.0
        %696 = vmatpush1.msra.mxu0 0.0
        %697 = vmatprep.subr.mxu0 0.0
        %698 = vmatpush1.msra.mxu0 0.0
        %699 = vmatprep.subr.mxu0 0.0
        %700 = vmatpush1.msra.mxu0 0.0
        %701 = vmatprep.subr.mxu0 0.0
        %702 = vmatpush1.msra.mxu0 0.0
        %703 = vmatprep.subr.mxu0 0.0
        %704 = vmatpush1.msra.mxu0 0.0
        %705 = vmatprep.subr.mxu0 0.0
        %706 = vmatpush1.msra.mxu0 0.0
        %707 = vmatprep.subr.mxu0 0.0
        %708 = vmatpush1.msra.mxu0 %v675
        %709 = vmatprep.subr.mxu0 0.0
        %710 = vmatpush1.msra.mxu0 %v674
        %711 = vmatprep.subr.mxu0 0.0
        %712 = vmatpush1.msra.mxu0 %v673
        %713 = vmatprep.subr.mxu0 0.0
        %714 = vmatpush1.msra.mxu0 %v672
        %715 = vmatprep.subr.mxu0 0.0
        %716 = vmatpush2.msra.mxu0 0.0
        %717 = vmatprep.subr.mxu0 0.0
        %718 = vmatpush2.msra.mxu0 0.0
        %719 = vmatprep.subr.mxu0 0.0
        %720 = vmatpush2.msra.mxu0 0.0
        %721 = vmatprep.subr.mxu0 0.0
        %722 = vmatpush2.msra.mxu0 0.0
        %723 = vmatprep.subr.mxu0 0.0
        %724 = vmatpush2.msra.mxu0 0.0
        %725 = vmatprep.subr.mxu0 0.0
        %726 = vmatpush2.msra.mxu0 0.0
        %727 = vmatprep.subr.mxu0 0.0
        %728 = vmatpush2.msra.mxu0 0.0
        %729 = vmatprep.subr.mxu0 0.0
        %730 = vmatpush2.msra.mxu0 0.0
        %731 = vmatprep.subr.mxu0 0.0
        %732 = vmatpush2.msra.mxu0 0.0
        %733 = vmatprep.subr.mxu0 0.0
        %734 = vmatpush2.msra.mxu0 0.0
        %735 = vmatprep.subr.mxu0 0.0
        %736 = vmatpush2.msra.mxu0 0.0
        %737 = vmatprep.subr.mxu0 0.0
        %738 = vmatpush2.msra.mxu0 0.0
        %739 = vmatprep.subr.mxu0 0.0
        %740 = vmatpush2.msra.mxu0 0.0
        %741 = vmatprep.subr.mxu0 0.0
        %742 = vmatpush2.msra.mxu0 0.0
        %743 = vmatprep.subr.mxu0 0.0
        %744 = vmatpush2.msra.mxu0 0.0
        %745 = vmatprep.subr.mxu0 0.0
        %746 = vmatpush2.msra.mxu0 0.0
        %747 = vmatprep.mubr.f32.mxu0 0.0
        %748 = vmatmul.mubr.f32.gmra.mxu0 %v519
        %v749 = vpop.f32.mrf.mxu0
        %v750 = vadd.f32 %v681, %v749
        %v751 = vpop.f32.mrf.mxu0
        %752 = vdwg.mxu0
        %vm753 = vcmask 64512
        %v755 = vsel %vm753, %v588, 0
        %v758 = vsel %vm753, %v669, 0
        %760 = vmatprep.subr.mxu0 0.0
        %761 = vmatpush1.xpose.msra.mxu0 0.0
        %762 = vmatprep.subr.mxu0 0.0
        %763 = vmatpush1.xpose.msra.mxu0 0.0
        %764 = vmatprep.subr.mxu0 0.0
        %765 = vmatpush1.xpose.msra.mxu0 0.0
        %766 = vmatprep.subr.mxu0 0.0
        %767 = vmatpush1.xpose.msra.mxu0 0.0
        %768 = vmatprep.subr.mxu0 0.0
        %769 = vmatpush1.xpose.msra.mxu0 0.0
        %770 = vmatprep.subr.mxu0 0.0
        %771 = vmatpush1.xpose.msra.mxu0 0.0
        %772 = vmatprep.subr.mxu0 0.0
        %773 = vmatpush1.xpose.msra.mxu0 0.0
        %774 = vmatprep.subr.mxu0 0.0
        %775 = vmatpush1.xpose.msra.mxu0 0.0
        %776 = vmatprep.subr.mxu0 0.0
        %777 = vmatpush1.xpose.msra.mxu0 0.0
        %778 = vmatprep.subr.mxu0 0.0
        %779 = vmatpush1.xpose.msra.mxu0 0.0
        %780 = vmatprep.subr.mxu0 0.0
        %781 = vmatpush1.xpose.msra.mxu0 0.0
        %782 = vmatprep.subr.mxu0 0.0
        %783 = vmatpush1.xpose.msra.mxu0 0.0
        %784 = vmatprep.subr.mxu0 0.0
        %785 = vmatpush1.xpose.msra.mxu0 0.0
        %786 = vmatprep.subr.mxu0 0.0
        %787 = vmatpush1.xpose.msra.mxu0 0.0
        %788 = vmatprep.subr.mxu0 0.0
        %789 = vmatpush1.xpose.msra.mxu0 0.0
        %790 = vmatprep.subr.mxu0 0.0
        %791 = vmatpush1.xpose.msra.mxu0 %v758
        %792 = vmatprep.subr.mxu0 0.0
        %793 = vmatpush2.xpose.msra.mxu0 0.0
        %794 = vmatprep.subr.mxu0 0.0
        %795 = vmatpush2.xpose.msra.mxu0 0.0
        %796 = vmatprep.subr.mxu0 0.0
        %797 = vmatpush2.xpose.msra.mxu0 0.0
        %798 = vmatprep.subr.mxu0 0.0
        %799 = vmatpush2.xpose.msra.mxu0 0.0
        %800 = vmatprep.subr.mxu0 0.0
        %801 = vmatpush2.xpose.msra.mxu0 0.0
        %802 = vmatprep.subr.mxu0 0.0
        %803 = vmatpush2.xpose.msra.mxu0 0.0
        %804 = vmatprep.subr.mxu0 0.0
        %805 = vmatpush2.xpose.msra.mxu0 0.0
        %806 = vmatprep.subr.mxu0 0.0
        %807 = vmatpush2.xpose.msra.mxu0 0.0
        %808 = vmatprep.subr.mxu0 0.0
        %809 = vmatpush2.xpose.msra.mxu0 0.0
        %810 = vmatprep.subr.mxu0 0.0
        %811 = vmatpush2.xpose.msra.mxu0 0.0
        %812 = vmatprep.subr.mxu0 0.0
        %813 = vmatpush2.xpose.msra.mxu0 0.0
        %814 = vmatprep.subr.mxu0 0.0
        %815 = vmatpush2.xpose.msra.mxu0 0.0
        %816 = vmatprep.subr.mxu0 0.0
        %817 = vmatpush2.xpose.msra.mxu0 0.0
        %818 = vmatprep.subr.mxu0 0.0
        %819 = vmatpush2.xpose.msra.mxu0 0.0
        %820 = vmatprep.subr.mxu0 0.0
        %821 = vmatpush2.xpose.msra.mxu0 0.0
        %822 = vmatprep.subr.mxu0 0.0
        %823 = vmatpush2.xpose.msra.mxu0 0.0
        %824 = vmatprep.mubr.f32.mxu0 0.0
        %825 = vmatmul.mubr.f32.gmra.mxu0 %v755
        %v826 = vpop.f32.mrf.mxu0
        %v827 = vadd.f32 0.0, %v826
        %v828 = vpop.f32.mrf.mxu0
        %829 = vdwg.mxu0
        %v830 = vmul.f32 %v827, 0.35355338
        %v831 = vsel %vm753, %v830, -inf
        %832 = vmax.xlane.f32.xlu0 %v831
        %v833 = vpop.xlane.xlu0 %832
        %v834 = vsub.f32 %v830, %v833
        %v835 = vmul.f32 %v834, 1.442695
        %v836 = vpow.pop %v835
        %v837 = vsel %vm753, %v836, 0.0
        %838 = vadd.xlane.f32.xlu0 %v837
        %v839 = vpop.xlane.xlu0 %838
        %v840 = vrcp.pop %v839
        %v841 = vmul.f32 %v836, %v840
        %842 = vst.msk [vmem:[%s466] sm:$0xff] %vm753, %v841
        %v844 = vsel %vm753, %v841, 0
        %846 = vmatprep.subr.mxu0 0.0
        %847 = vmatpush1.msra.mxu0 0.0
        %848 = vmatprep.subr.mxu0 0.0
        %849 = vmatpush1.msra.mxu0 0.0
        %850 = vmatprep.subr.mxu0 0.0
        %851 = vmatpush1.msra.mxu0 0.0
        %852 = vmatprep.subr.mxu0 0.0
        %853 = vmatpush1.msra.mxu0 0.0
        %854 = vmatprep.subr.mxu0 0.0
        %855 = vmatpush1.msra.mxu0 0.0
        %856 = vmatprep.subr.mxu0 0.0
        %857 = vmatpush1.msra.mxu0 0.0
        %858 = vmatprep.subr.mxu0 0.0
        %859 = vmatpush1.msra.mxu0 0.0
        %860 = vmatprep.subr.mxu0 0.0
        %861 = vmatpush1.msra.mxu0 0.0
        %862 = vmatprep.subr.mxu0 0.0
        %863 = vmatpush1.msra.mxu0 0.0
        %864 = vmatprep.subr.mxu0 0.0
        %865 = vmatpush1.msra.mxu0 0.0
        %866 = vmatprep.subr.mxu0 0.0
        %867 = vmatpush1.msra.mxu0 0.0
        %868 = vmatprep.subr.mxu0 0.0
        %869 = vmatpush1.msra.mxu0 0.0
        %870 = vmatprep.subr.mxu0 0.0
        %871 = vmatpush1.msra.mxu0 0.0
        %872 = vmatprep.subr.mxu0 0.0
        %873 = vmatpush1.msra.mxu0 0.0
        %874 = vmatprep.subr.mxu0 0.0
        %875 = vmatpush1.msra.mxu0 0.0
        %876 = vmatprep.subr.mxu0 0.0
        %877 = vmatpush1.msra.mxu0 %v750
        %878 = vmatprep.subr.mxu0 0.0
        %879 = vmatpush2.msra.mxu0 0.0
        %880 = vmatprep.subr.mxu0 0.0
        %881 = vmatpush2.msra.mxu0 0.0
        %882 = vmatprep.subr.mxu0 0.0
        %883 = vmatpush2.msra.mxu0 0.0
        %884 = vmatprep.subr.mxu0 0.0
        %885 = vmatpush2.msra.mxu0 0.0
        %886 = vmatprep.subr.mxu0 0.0
        %887 = vmatpush2.msra.mxu0 0.0
        %888 = vmatprep.subr.mxu0 0.0
        %889 = vmatpush2.msra.mxu0 0.0
        %890 = vmatprep.subr.mxu0 0.0
        %891 = vmatpush2.msra.mxu0 0.0
        %892 = vmatprep.subr.mxu0 0.0
        %893 = vmatpush2.msra.mxu0 0.0
        %894 = vmatprep.subr.mxu0 0.0
        %895 = vmatpush2.msra.mxu0 0.0
        %896 = vmatprep.subr.mxu0 0.0
        %897 = vmatpush2.msra.mxu0 0.0
        %898 = vmatprep.subr.mxu0 0.0
        %899 = vmatpush2.msra.mxu0 0.0
        %900 = vmatprep.subr.mxu0 0.0
        %901 = vmatpush2.msra.mxu0 0.0
        %902 = vmatprep.subr.mxu0 0.0
        %903 = vmatpush2.msra.mxu0 0.0
        %904 = vmatprep.subr.mxu0 0.0
        %905 = vmatpush2.msra.mxu0 0.0
        %906 = vmatprep.subr.mxu0 0.0
        %907 = vmatpush2.msra.mxu0 0.0
        %908 = vmatprep.subr.mxu0 0.0
        %909 = vmatpush2.msra.mxu0 0.0
        %910 = vmatprep.mubr.f32.mxu0 0.0
        %911 = vmatmul.mubr.f32.gmra.mxu0 %v844
        %v912 = vpop.f32.mrf.mxu0
        %v913 = vadd.f32 0.0, %v912
        %v914 = vpop.f32.mrf.mxu0
        %915 = vdwg.mxu0
        %v916 = vld [vmem:[#allocation2] sm:$0xff]
        %v917 = vld [vmem:[%s498] sm:$0xff]
        %v919 = vsel %vm753, %v913, 0
        %921 = vmatprep.subr.mxu0 0.0
        %922 = vmatpush1.msra.mxu0 0.0
        %923 = vmatprep.subr.mxu0 0.0
        %924 = vmatpush1.msra.mxu0 0.0
        %925 = vmatprep.subr.mxu0 0.0
        %926 = vmatpush1.msra.mxu0 0.0
        %927 = vmatprep.subr.mxu0 0.0
        %928 = vmatpush1.msra.mxu0 0.0
        %929 = vmatprep.subr.mxu0 0.0
        %930 = vmatpush1.msra.mxu0 0.0
        %931 = vmatprep.subr.mxu0 0.0
        %932 = vmatpush1.msra.mxu0 0.0
        %933 = vmatprep.subr.mxu0 0.0
        %934 = vmatpush1.msra.mxu0 0.0
        %935 = vmatprep.subr.mxu0 0.0
        %936 = vmatpush1.msra.mxu0 0.0
        %937 = vmatprep.subr.mxu0 0.0
        %938 = vmatpush1.msra.mxu0 0.0
        %939 = vmatprep.subr.mxu0 0.0
        %940 = vmatpush1.msra.mxu0 0.0
        %941 = vmatprep.subr.mxu0 0.0
        %942 = vmatpush1.msra.mxu0 0.0
        %943 = vmatprep.subr.mxu0 0.0
        %944 = vmatpush1.msra.mxu0 0.0
        %945 = vmatprep.subr.mxu0 0.0
        %946 = vmatpush1.msra.mxu0 0.0
        %947 = vmatprep.subr.mxu0 0.0
        %948 = vmatpush1.msra.mxu0 0.0
        %949 = vmatprep.subr.mxu0 0.0
        %950 = vmatpush1.msra.mxu0 0.0
        %951 = vmatprep.subr.mxu0 0.0
        %952 = vmatpush1.msra.mxu0 %v917
        %953 = vmatprep.subr.mxu0 0.0
        %954 = vmatpush2.msra.mxu0 0.0
        %955 = vmatprep.subr.mxu0 0.0
        %956 = vmatpush2.msra.mxu0 0.0
        %957 = vmatprep.subr.mxu0 0.0
        %958 = vmatpush2.msra.mxu0 0.0
        %959 = vmatprep.subr.mxu0 0.0
        %960 = vmatpush2.msra.mxu0 0.0
        %961 = vmatprep.subr.mxu0 0.0
        %962 = vmatpush2.msra.mxu0 0.0
        %963 = vmatprep.subr.mxu0 0.0
        %964 = vmatpush2.msra.mxu0 0.0
        %965 = vmatprep.subr.mxu0 0.0
        %966 = vmatpush2.msra.mxu0 0.0
        %967 = vmatprep.subr.mxu0 0.0
        %968 = vmatpush2.msra.mxu0 0.0
        %969 = vmatprep.subr.mxu0 0.0
        %970 = vmatpush2.msra.mxu0 0.0
        %971 = vmatprep.subr.mxu0 0.0
        %972 = vmatpush2.msra.mxu0 0.0
        %973 = vmatprep.subr.mxu0 0.0
        %974 = vmatpush2.msra.mxu0 0.0
        %975 = vmatprep.subr.mxu0 0.0
        %976 = vmatpush2.msra.mxu0 0.0
        %977 = vmatprep.subr.mxu0 0.0
        %978 = vmatpush2.msra.mxu0 0.0
        %979 = vmatprep.subr.mxu0 0.0
        %980 = vmatpush2.msra.mxu0 0.0
        %981 = vmatprep.subr.mxu0 0.0
        %982 = vmatpush2.msra.mxu0 0.0
        %983 = vmatprep.subr.mxu0 0.0
        %984 = vmatpush2.msra.mxu0 0.0
        %985 = vmatprep.mubr.f32.mxu0 0.0
        %986 = vmatmul.mubr.f32.gmra.mxu0 %v919
        %v987 = vpop.f32.mrf.mxu0
        %v988 = vadd.f32 0.0, %v987
        %v989 = vpop.f32.mrf.mxu0
        %990 = vdwg.mxu0
        %v991 = vadd.f32 %v916, %v988
        %992 = vst.msk [vmem:[#allocation2] sm:$0xff] %vm517, %v991
        %p993 = scmp.eq.s32.totalorder %s33, 3
        // Predicated region
        $region61: #{tpu_custom_call.1} parent=55 // pred_check
          %p994 = pneg %p993
        $region62: #{tpu_custom_call.1} parent=55 // pred_check_branch
          %996 = sbr.rel (%p994) target = $region64
        $region63: #{tpu_custom_call.1} parent=55 // pred_region
          %v997 = vld [vmem:[#allocation2] sm:$0xff]
          %v998 = vld [vmem:[%s8] sm:$0x1]
          %v1000 = vlaneseq
          %v1001 = vshrl.u32 %v1000, 7
          %v1002 = vsub.s32 0, %v1001
          %v1003 = vrot.slane %v998, %v1002
          %v1005 = vadd.f32 %v997, %v1003
          %1006 = vst.msk [vmem:[%s459] sm:$0xff] %vm517, %v1005
        $region64: #{tpu_custom_call.1} parent=55 // pred_fallthru
          _
        %s1007 = sand.u32 %s277, 1
        %s1008 = scalar_lea.sflag [#allocation4], %s1007
        %s1009 = sand.u32 %s277, 1
        %s1010 = smul.addr %s1009, 8
        %s1011 = scalar_lea.vmem [#allocation3], %s1010
        %s1012 = sand.u32 %s305, 1
        %s1013 = scalar_lea.sflag [#allocation6], %s1012
        %s1014 = sand.u32 %s305, 1
        %s1015 = smul.addr %s1014, 8
        %s1016 = scalar_lea.vmem [#allocation5], %s1015
        // Predicated region
        $region65: #{tpu_custom_call.1} parent=55 // pred_check
          %p1017 = pneg %p287
        $region66: #{tpu_custom_call.1} parent=55 // pred_check_branch
          %1019 = sbr.rel (%p1017) target = $region68
        $region67: #{tpu_custom_call.1} parent=55 // pred_region
          %s1021 = ssub.s32 128, 128
          %1022 = vsyncadd %s1008, %s1021
          %s1023 = smul.addr %s32, 128
          %s1024 = scalar_lea.hbm %s9, %s1023
          %s1026 = sshll.u32 %s1011, 4
          %s1027 = int_to_ptr.vmem [resolvable:$true] %s1026
          %1029 = dma.vmem_to_hbm [thread:$0]  %s1027, 128, %s1024, %s1008
        $region68: #{tpu_custom_call.1} parent=55 // pred_fallthru
          _
        // Predicated region
        $region69: #{tpu_custom_call.1} parent=55 // pred_check
          %p1030 = pneg %p315
        $region70: #{tpu_custom_call.1} parent=55 // pred_check_branch
          %1032 = sbr.rel (%p1030) target = $region72
        $region71: #{tpu_custom_call.1} parent=55 // pred_region
          %s1034 = ssub.s32 128, 128
          %1035 = vsyncadd %s1013, %s1034
          %s1036 = smul.addr %s32, 4
          %s1037 = sadd.s32 %s33, %s1036
          %s1038 = smul.addr %s1037, 128
          %s1039 = scalar_lea.hbm %s10, %s1038
          %s1041 = sshll.u32 %s1016, 4
          %s1042 = int_to_ptr.vmem [resolvable:$true] %s1041
          %1044 = dma.vmem_to_hbm [thread:$0]  %s1042, 128, %s1039, %s1013
        $region72: #{tpu_custom_call.1} parent=55 // pred_fallthru
          _
      $region56: #{tpu_custom_call.1} parent=5 // pred_fallthru
        _
      %p1045 = scmp.le.s32.totalorder 2, %s23
      // Predicated region
      $region73: #{tpu_custom_call.1} parent=5 // pred_check
        %p1046 = pneg %p1045
      $region74: #{tpu_custom_call.1} parent=5 // pred_check_branch
        %1048 = sbr.rel (%p1046) target = $region76
      $region75: #{tpu_custom_call.1} parent=5 // pred_region
        %s1049 = ssub.s32 %s23, 2
        // Predicated region
        $region77: #{tpu_custom_call.1} parent=75 // pred_check
          %p1050 = pneg %p293
        $region78: #{tpu_custom_call.1} parent=75 // pred_check_branch
          %1052 = sbr.rel (%p1050) target = $region80
        $region79: #{tpu_custom_call.1} parent=75 // pred_region
          %s1053 = sand.u32 %s278, 1
          %s1054 = scalar_lea.sflag [#allocation4], %s1053
          %s1055 = sand.u32 %s278, 1
          %s1056 = smul.addr %s1055, 8
          %s1057 = scalar_lea.vmem [#allocation3], %s1056
          %1058 = dma.done %s1054, 128
        $region80: #{tpu_custom_call.1} parent=75 // pred_fallthru
          _
        // Predicated region
        $region81: #{tpu_custom_call.1} parent=75 // pred_check
          %p1059 = pneg %p321
        $region82: #{tpu_custom_call.1} parent=75 // pred_check_branch
          %1061 = sbr.rel (%p1059) target = $region84
        $region83: #{tpu_custom_call.1} parent=75 // pred_region
          %s1062 = sand.u32 %s306, 1
          %s1063 = scalar_lea.sflag [#allocation6], %s1062
          %s1064 = sand.u32 %s306, 1
          %s1065 = smul.addr %s1064, 8
          %s1066 = scalar_lea.vmem [#allocation5], %s1065
          %1067 = dma.done %s1063, 128
        $region84: #{tpu_custom_call.1} parent=75 // pred_fallthru
          _
      $region76: #{tpu_custom_call.1} parent=5 // pred_fallthru
        _
    $region6: #{tpu_custom_call.1} parent=1 // loop_footer
      %s27 = sadd.s32 1, %s23
    $region7: #{tpu_custom_call.1} parent=1 // loop_footer_branch
      %22 = sbr.rel target = $region3
    $region8: #{tpu_custom_call.1} parent=1 // loop_exit
      _
    %1068 = vsyncpa [#allocation4], 1
    %s1069 = scalar_lea.sflag [#allocation4], 1
    %1070 = vsyncpa %s1069, 1
    %1071 = vsyncpa [#allocation6], 1
    %s1072 = scalar_lea.sflag [#allocation6], 1
    %1073 = vsyncpa %s1072, 1

</llo_original>
